<compile_context>
chip_gen: v5e
topology: v5e:2x2
jax: 0.10.0
libtpu: 0.0.40
codegen_flags: <defaults>
</compile_context>

<pallas_src>
import functools

import jax
import jax.numpy as jnp
from jax import lax
from jax.experimental import pallas as pl
from jax.experimental.pallas import tpu as pltpu


def _contrastive_loss_kernel(f1_ref, f2_ref, aux_ref, out_ref, acc_ref,
                             *, margin, eps, batch):
    i = pl.program_id(0)

    @pl.when(i == 0)
    def _init():
        acc_ref[...] = jnp.zeros_like(acc_ref)

    f1 = f1_ref[...].astype(jnp.float32)                       # (TB, D)
    f2 = f2_ref[...].astype(jnp.float32)                       # (TB, D)

    # Per-row cosine similarity along the feature (lane) axis.
    dot = jnp.sum(f1 * f2, axis=1, keepdims=True)              # (TB, 1)
    s1 = jnp.sum(f1 * f1, axis=1, keepdims=True)               # (TB, 1)
    s2 = jnp.sum(f2 * f2, axis=1, keepdims=True)               # (TB, 1)
    # max(||f1||*||f2||, eps) == sqrt(max(s1*s2, eps^2)) for s1,s2 >= 0:
    # one EUP rsqrt + one VPU mul instead of two sqrt + one divide.
    cos = dot * lax.rsqrt(jnp.maximum(s1 * s2, eps * eps))     # (TB, 1)
    dists = 1.0 - cos                                          # (TB, 1)

    aux = aux_ref[...].astype(jnp.float32)                     # (TB, 3)
    label = aux[:, 0:1]
    lr = aux[:, 1:2]
    valid = aux[:, 2:3]                                        # 0 for padded rows

    m_norms = margin * lr
    pos = label * dists * dists
    hinge = jnp.maximum(m_norms - dists, 0.0)
    neg = (1.0 - label) * hinge * hinge

    acc_ref[...] += jnp.sum(valid * (pos + neg), axis=0, keepdims=True)

    @pl.when(i == pl.num_programs(0) - 1)
    def _finalize():
        out_ref[0, 0] = acc_ref[0, 0] * (1.0 / batch)


def _pick_block_rows(batch, feat, itemsize):
    """Largest multiple-of-8 row tile whose pipelined buffers fit a safe VMEM budget."""
    # 2 feature inputs x 2 pipeline buffers (+ tiny aux tile), ~24 MiB budget so it
    # stays well inside v7x's 64 MiB physical / 32 MiB scoped VMEM with headroom.
    budget = 24 * 1024 * 1024
    per_row = 4 * feat * itemsize + 4 * 3 * 4
    max_rows = max(8, budget // max(per_row, 1))
    padded_b = -(-batch // 8) * 8
    tb = min(1024, max_rows, padded_b)
    return max(8, (tb // 8) * 8)


def contrastive_loss(f1, f2, label, lr_norms, margin=0.5, eps=1e-6):
    """f1, f2: (B, D) float32/bfloat16; label, lr_norms: (B,). Returns scalar f32 loss."""
    B, D = f1.shape
    itemsize = jnp.dtype(f1.dtype).itemsize

    TB = _pick_block_rows(B, D, itemsize)
    num_tiles = pl.cdiv(B, TB)
    Bp = num_tiles * TB
    pad = Bp - B

    # Pack label / lr_norms / valid-mask into one aux array -> one DMA per tile.
    aux = jnp.stack(
        [label.reshape(-1).astype(jnp.float32),
         lr_norms.reshape(-1).astype(jnp.float32),
         jnp.ones((B,), jnp.float32)],
        axis=1,
    )                                                          # (B, 3)
    if pad:
        f1 = jnp.pad(f1, ((0, pad), (0, 0)))
        f2 = jnp.pad(f2, ((0, pad), (0, 0)))
        aux = jnp.pad(aux, ((0, pad), (0, 0)))                 # padded rows: valid = 0

    kernel = functools.partial(
        _contrastive_loss_kernel,
        margin=float(margin), eps=float(eps), batch=float(B),
    )

    out = pl.pallas_call(
        kernel,
        out_shape=jax.ShapeDtypeStruct((1, 1), jnp.float32),
        grid=(num_tiles,),
        in_specs=[
            pl.BlockSpec((TB, D), lambda i: (i, 0)),
            pl.BlockSpec((TB, D), lambda i: (i, 0)),
            pl.BlockSpec((TB, 3), lambda i: (i, 0)),
        ],
        out_specs=pl.BlockSpec(memory_space=pltpu.MemorySpace.SMEM),
        scratch_shapes=[pltpu.VMEM((1, 1), jnp.float32)],
        compiler_params=pltpu.CompilerParams(
            dimension_semantics=("arbitrary",),      # shared accumulator across tiles
            vmem_limit_bytes=48 * 1024 * 1024,
        ),
        cost_estimate=pl.CostEstimate(
            flops=6 * Bp * D + 8 * Bp,
            transcendentals=Bp,
            bytes_accessed=2 * Bp * D * itemsize + 12 * Bp + 4,
        ),
    )(f1, f2, aux)
    return out[0, 0]


def _reference_loss(f1, f2, label, lr_norms, margin=0.5, eps=1e-6):
    f1 = f1.astype(jnp.float32)
    f2 = f2.astype(jnp.float32)
    dot = jnp.sum(f1 * f2, axis=1)
    n1 = jnp.linalg.norm(f1, axis=1)
    n2 = jnp.linalg.norm(f2, axis=1)
    cos = dot / jnp.maximum(n1 * n2, eps)
    dists = 1.0 - cos
    m_norms = margin * lr_norms
    return jnp.mean(
        label * dists**2 + (1.0 - label) * jnp.maximum(m_norms - dists, 0.0) ** 2
    )


if __name__ == "__main__":
    key = jax.random.PRNGKey(0)
    k1, k2, k3, k4 = jax.random.split(key, 4)

    # Case 1: batch is a multiple of the sublane size.
    B, D = 8, 32
    f1 = jax.random.normal(k1, (B, D), dtype=jnp.float32)
    f2 = jax.random.normal(k2, (B, D), dtype=jnp.float32)
    label = (jax.random.uniform(k3, (B,)) > 0.5).astype(jnp.float32)
    lr_norms = jax.random.uniform(k4, (B,), minval=0.5, maxval=2.0, dtype=jnp.float32)

    loss = contrastive_loss(f1, f2, label, lr_norms, margin=0.5)
    jax.block_until_ready(loss)
    ref = _reference_loss(f1, f2, label, lr_norms, margin=0.5)
    assert jnp.allclose(loss, ref, rtol=1e-5, atol=1e-5), (loss, ref)

    # Case 2: ragged batch (exercises the padded-row masking).
    B2 = 13
    f1b = jax.random.normal(k2, (B2, D), dtype=jnp.float32)
    f2b = jax.random.normal(k3, (B2, D), dtype=jnp.float32)
    labelb = (jax.random.uniform(k4, (B2,)) > 0.5).astype(jnp.float32)
    lrb = jax.random.uniform(k1, (B2,), minval=0.5, maxval=2.0, dtype=jnp.float32)

    loss2 = contrastive_loss(f1b, f2b, labelb, lrb, margin=0.5)
    jax.block_until_ready(loss2)
    ref2 = _reference_loss(f1b, f2b, labelb, lrb, margin=0.5)
    assert jnp.allclose(loss2, ref2, rtol=1e-5, atol=1e-5), (loss2, ref2)

    print("KERNEL_OK")
</pallas_src>

<mosaic_0001>
module attributes {stable_mosaic.version = 11 : i64} {
  func.func @_contrastive_loss_kernel(%arg0: i32, %arg1: memref<8x32xf32, #tpu.memory_space<vmem>>, %arg2: memref<8x32xf32, #tpu.memory_space<vmem>>, %arg3: memref<8x3xf32, #tpu.memory_space<vmem>>, %arg4: memref<1x1xf32, #tpu.memory_space<smem>>, %arg5: memref<1x1xf32, #tpu.memory_space<vmem>>) attributes {dimension_semantics = [#tpu.dimension_semantics<arbitrary>], iteration_bounds = array<i64: 1>, scalar_prefetch = 0 : i64, scratch_operands = 1 : i64, tpu.core_type = #tpu.core_type<tc>, window_params = [{transform_indices = @transform_0, window_bounds = array<i64: 8, 32>}, {transform_indices = @transform_1, window_bounds = array<i64: 8, 32>}, {transform_indices = @transform_2, window_bounds = array<i64: 8, 3>}, {transform_indices = @transform_3, window_bounds = array<i64: 1, 1>}]} {
    %c0_i32 = arith.constant 0 : i32
    %0 = arith.cmpi eq, %arg0, %c0_i32 : i32
    %1 = arith.extui %0 : i1 to i32
    %c0_i32_0 = arith.constant 0 : i32
    %2 = arith.cmpi ne, %1, %c0_i32_0 : i32
    scf.if %2 {
      %cst_20 = arith.constant 0.000000e+00 : f32
      %46 = vector.broadcast %cst_20 : f32 to vector<1x1xf32>
      %c0_21 = arith.constant 0 : index
      %c0_22 = arith.constant 0 : index
      %47 = vector.load %arg5[%c0_21, %c0_22] : memref<1x1xf32, #tpu.memory_space<vmem>>, vector<1x1xf32>
      tpu.vector_store %arg5[%c0_21, %c0_22], %46 {strides = array<i32>} : memref<1x1xf32, #tpu.memory_space<vmem>>, vector<1x1xf32>,
    } else {
    }
    %c0 = arith.constant 0 : index
    %c0_1 = arith.constant 0 : index
    %3 = vector.load %arg1[%c0, %c0_1] : memref<8x32xf32, #tpu.memory_space<vmem>>, vector<8x32xf32>
    %c0_2 = arith.constant 0 : index
    %c0_3 = arith.constant 0 : index
    %4 = vector.load %arg2[%c0_2, %c0_3] : memref<8x32xf32, #tpu.memory_space<vmem>>, vector<8x32xf32>
    %5 = arith.mulf %3, %4 : vector<8x32xf32>
    %cst = arith.constant dense<0.000000e+00> : vector<8xf32>
    %6 = vector.multi_reduction <add>, %5, %cst [1] : vector<8x32xf32> to vector<8xf32>
    %7 = vector.shape_cast %6 : vector<8xf32> to vector<8x1xf32>
    %8 = arith.mulf %3, %3 : vector<8x32xf32>
    %cst_4 = arith.constant dense<0.000000e+00> : vector<8xf32>
    %9 = vector.multi_reduction <add>, %8, %cst_4 [1] : vector<8x32xf32> to vector<8xf32>
    %10 = vector.shape_cast %9 : vector<8xf32> to vector<8x1xf32>
    %11 = arith.mulf %4, %4 : vector<8x32xf32>
    %cst_5 = arith.constant dense<0.000000e+00> : vector<8xf32>
    %12 = vector.multi_reduction <add>, %11, %cst_5 [1] : vector<8x32xf32> to vector<8xf32>
    %13 = vector.shape_cast %12 : vector<8xf32> to vector<8x1xf32>
    %14 = arith.mulf %10, %13 : vector<8x1xf32>
    %cst_6 = arith.constant 9.99999996E-13 : f32
    %15 = vector.broadcast %cst_6 : f32 to vector<8x1xf32>
    %16 = arith.maximumf %14, %15 : vector<8x1xf32>
    %17 = math.rsqrt %16 : vector<8x1xf32>
    %18 = arith.mulf %7, %17 : vector<8x1xf32>
    %cst_7 = arith.constant 1.000000e+00 : f32
    %19 = vector.broadcast %cst_7 : f32 to vector<8x1xf32>
    %20 = arith.subf %19, %18 : vector<8x1xf32>
    %c0_8 = arith.constant 0 : index
    %c0_9 = arith.constant 0 : index
    %21 = vector.load %arg3[%c0_8, %c0_9] : memref<8x3xf32, #tpu.memory_space<vmem>>, vector<8x3xf32>
    %22 = vector.extract_strided_slice %21 {offsets = [0, 0], sizes = [8, 1], strides = [1, 1]} : vector<8x3xf32> to vector<8x1xf32>
    %23 = vector.extract_strided_slice %21 {offsets = [0, 1], sizes = [8, 1], strides = [1, 1]} : vector<8x3xf32> to vector<8x1xf32>
    %24 = vector.extract_strided_slice %21 {offsets = [0, 2], sizes = [8, 1], strides = [1, 1]} : vector<8x3xf32> to vector<8x1xf32>
    %cst_10 = arith.constant 5.000000e-01 : f32
    %25 = vector.broadcast %cst_10 : f32 to vector<8x1xf32>
    %26 = arith.mulf %25, %23 : vector<8x1xf32>
    %27 = arith.mulf %22, %20 : vector<8x1xf32>
    %28 = arith.mulf %27, %20 : vector<8x1xf32>
    %29 = arith.subf %26, %20 : vector<8x1xf32>
    %cst_11 = arith.constant 0.000000e+00 : f32
    %30 = vector.broadcast %cst_11 : f32 to vector<8x1xf32>
    %31 = arith.maximumf %29, %30 : vector<8x1xf32>
    %cst_12 = arith.constant 1.000000e+00 : f32
    %32 = vector.broadcast %cst_12 : f32 to vector<8x1xf32>
    %33 = arith.subf %32, %22 : vector<8x1xf32>
    %34 = arith.mulf %33, %31 : vector<8x1xf32>
    %35 = arith.mulf %34, %31 : vector<8x1xf32>
    %c0_13 = arith.constant 0 : index
    %c0_14 = arith.constant 0 : index
    %36 = vector.load %arg5[%c0_13, %c0_14] : memref<1x1xf32, #tpu.memory_space<vmem>>, vector<1x1xf32>
    %37 = arith.addf %28, %35 : vector<8x1xf32>
    %38 = arith.mulf %24, %37 : vector<8x1xf32>
    %cst_15 = arith.constant dense<0.000000e+00> : vector<1xf32>
    %39 = vector.multi_reduction <add>, %38, %cst_15 [0] : vector<8x1xf32> to vector<1xf32>
    %40 = vector.shape_cast %39 : vector<1xf32> to vector<1x1xf32>
    %41 = arith.addf %36, %40 : vector<1x1xf32>
    %c0_16 = arith.constant 0 : index
    %c0_17 = arith.constant 0 : index
    %42 = vector.load %arg5[%c0_16, %c0_17] : memref<1x1xf32, #tpu.memory_space<vmem>>, vector<1x1xf32>
    tpu.vector_store %arg5[%c0_16, %c0_17], %41 {strides = array<i32>} : memref<1x1xf32, #tpu.memory_space<vmem>>, vector<1x1xf32>,
    %c0_i32_18 = arith.constant 0 : i32
    %43 = arith.cmpi eq, %arg0, %c0_i32_18 : i32
    %44 = arith.extui %43 : i1 to i32
    %c0_i32_19 = arith.constant 0 : i32
    %45 = arith.cmpi ne, %44, %c0_i32_19 : i32
    scf.if %45 {
      %c0_20 = arith.constant 0 : index
      %c0_21 = arith.constant 0 : index
      %46 = vector.load %arg5[%c0_20, %c0_21] : memref<1x1xf32, #tpu.memory_space<vmem>>, vector<1x1xf32>
      %47 = vector.extract %46[0, 0] : f32 from vector<1x1xf32>
      %cst_22 = arith.constant 1.250000e-01 : f32
      %48 = arith.mulf %47, %cst_22 : f32
      %c0_23 = arith.constant 0 : index
      %c0_24 = arith.constant 0 : index
      %49 = memref.load %arg4[%c0_23, %c0_24] : memref<1x1xf32, #tpu.memory_space<smem>>
      memref.store %48, %arg4[%c0_23, %c0_24] : memref<1x1xf32, #tpu.memory_space<smem>>
    } else {
    }
    return
  }
  func.func @transform_0(%arg0: i32) -> (i32, i32) {
    %c0_i32 = arith.constant 0 : i32
    %c0_i32_0 = arith.constant 0 : i32
    return %arg0, %c0_i32 : i32, i32
  }
  func.func @transform_1(%arg0: i32) -> (i32, i32) {
    %c0_i32 = arith.constant 0 : i32
    %c0_i32_0 = arith.constant 0 : i32
    return %arg0, %c0_i32 : i32, i32
  }
  func.func @transform_2(%arg0: i32) -> (i32, i32) {
    %c0_i32 = arith.constant 0 : i32
    %c0_i32_0 = arith.constant 0 : i32
    return %arg0, %c0_i32 : i32, i32
  }
  func.func @transform_3(%arg0: i32) -> (i32, i32) {
    %c0_i32 = arith.constant 0 : i32
    %c0_i32_0 = arith.constant 0 : i32
    %c0_i32_1 = arith.constant 0 : i32
    return %c0_i32, %c0_i32_0 : i32, i32
  }
}

</mosaic_0001>

<llo_original>
// kernel: tpu_custom_call.1
$region0: #{tpu_custom_call.1}
  #allocation0 [shape = 'u32[]', space=smem, size = 0x4, offset = 0x4, fixed_abs, tag = 'smem constant byte address 0x4 - core index']
  #allocation1 [shape = 'u32[72,128]{1,0:T(1,128)}', space=vmem, size = 0x9000, scoped, tag = 'internal scratch']
  #allocation2 [shape = 'f32[1,1]{1,0:T(1,128)}', space=vmem, size = 0x200, scoped, tag = 'scratch operand']
  %s0 = inlined_call_operand.vmem [shape: f32[8,32], index: 0, kind: input, shape index: {}]
  %s1 = inlined_call_operand.hbm [shape: f32[8,32], index: 1, kind: input, shape index: {}]
  %s2 = inlined_call_operand.vmem [shape: f32[8,3], index: 2, kind: input, shape index: {}]
  %s3 = inlined_call_operand.hbm [shape: f32[1,1], index: 3, kind: output, shape index: {}]
  %s4 = sld [smem:[#allocation0]]
  $region34: #{tpu_custom_call.1} parent=0
    _
  %s6 = ssub.s32 1, %s4
  %s7 = scalar_select 0, %s6, %s4
  $region1: #{tpu_custom_call.1} parent=0
    #allocation3 [shape = 'u8[4096]{0}', space=vmem, size = 0x1000, scoped, tag = 'input window, operand 1, single buffered']
    #allocation4 [shape = 's32[1]{0}', space=sflag, size = 0x4, scoped, tag = 'scoped memory for tpu_custom_call.1']
    #allocation5 [shape = 's32[1]{0}', space=sflag, size = 0x4, scoped, tag = 'scoped memory for tpu_custom_call.1']
    #allocation6 [shape = 'u8[512]{0}', space=smem, size = 0x200, scoped, tag = 'output window, operand 0, single buffered']
    %8 = vsyncpa [#allocation4], 0
    %9 = vsyncpa [#allocation5], 0
    // Predicated region
    $region2: #{tpu_custom_call.1} parent=1 // pred_check
      _
    $region3: #{tpu_custom_call.1} parent=1 // pred_check_branch
      %11 = sbr.rel (0) target = $region5
    $region4: #{tpu_custom_call.1} parent=1 // pred_region
      _
    $region5: #{tpu_custom_call.1} parent=1 // pred_fallthru
      _
    // Predicated region
    $region6: #{tpu_custom_call.1} parent=1 // pred_check
      _
    $region7: #{tpu_custom_call.1} parent=1 // pred_check_branch
      %13 = sbr.rel (0) target = $region9
    $region8: #{tpu_custom_call.1} parent=1 // pred_region
      %15 = vsyncadd [#allocation4], 0
      %s17 = sshll.u32 %s1, 4
      %s18 = int_to_ptr.hbm [resolvable:$true] %s17
      %s19 = sshll.u32 [#allocation3], 4
      %s20 = int_to_ptr.vmem [resolvable:$true] %s19
      %22 = dma.hbm_to_vmem [thread:$0]  %s18, 128, %s20, [#allocation4]
    $region9: #{tpu_custom_call.1} parent=1 // pred_fallthru
      _
    // Predicated region
    $region10: #{tpu_custom_call.1} parent=1 // pred_check
      _
    $region11: #{tpu_custom_call.1} parent=1 // pred_check_branch
      %24 = sbr.rel (0) target = $region13
    $region12: #{tpu_custom_call.1} parent=1 // pred_region
      _
    $region13: #{tpu_custom_call.1} parent=1 // pred_fallthru
      _
    // Predicated region
    $region14: #{tpu_custom_call.1} parent=1 // pred_check
      _
    $region15: #{tpu_custom_call.1} parent=1 // pred_check_branch
      %26 = sbr.rel (0) target = $region17
    $region16: #{tpu_custom_call.1} parent=1 // pred_region
      %28 = dma.done [#allocation4], 128
    $region17: #{tpu_custom_call.1} parent=1 // pred_fallthru
      _
    %p29 = scmp.eq.s32.totalorder 0, 0
    // Predicated region
    $region18: #{tpu_custom_call.1} parent=1 // pred_check
      %p30 = pneg %p29
    $region19: #{tpu_custom_call.1} parent=1 // pred_check_branch
      %32 = sbr.rel (%p30) target = $region21
    $region20: #{tpu_custom_call.1} parent=1 // pred_region
      %vm33 = vcmask 0
      %34 = vst.msk [vmem:[#allocation2] sm:$0x1] %vm33, 0.0
    $region21: #{tpu_custom_call.1} parent=1 // pred_fallthru
      _
    %v35 = vld [vmem:[%s0] sm:$0xff]
    %v36 = vld [vmem:[#allocation3] sm:$0xff]
    %v37 = vmul.f32 %v35, %v36
    %vm38 = vcmask 261120
    %v39 = vsel %vm38, %v37, 0.0
    %40 = vadd.xlane.f32.xlu0 %v39
    %v41 = vpop.xlane.xlu0 %40
    %v42 = vmul.f32 %v35, %v35
    %v43 = vsel %vm38, %v42, 0.0
    %44 = vadd.xlane.f32.xlu0 %v43
    %v45 = vpop.xlane.xlu0 %44
    %v46 = vmul.f32 %v36, %v36
    %v47 = vsel %vm38, %v46, 0.0
    %48 = vadd.xlane.f32.xlu0 %v47
    %v49 = vpop.xlane.xlu0 %48
    %v50 = vmul.f32 %v45, %v49
    %v51 = vmax.f32 %v50, 1e-12
    %v52 = vrsqrt.pop %v51
    %v53 = vmul.f32 %v52, %v51
    %v54 = vmul.f32 %v53, %v52
    %v55 = vmul.f32 0.5, %v54
    %v56 = vsub.f32 1.5, %v55
    %v57 = vmul.f32 %v52, %v56
    %vm58 = vweird.f32 %v51
    %vm59 = vweird.f32 %v52
    %vm60 = vmor %vm58, %vm59
    %v61 = vsel %vm60, %v52, %v57
    %v62 = vmul.f32 %v41, %v61
    %v63 = vsub.f32 1.0, %v62
    %v64 = vld [vmem:[%s2] sm:$0xff]
    %v65 = vmul.f32 %v64, 0.5
    %v66 = vmul.f32 %v64, %v63
    %v67 = vmul.f32 %v66, %v63
    %v68 = vsub.f32 %v65, %v63
    %v69 = vmax.f32 %v68, 0.0
    %v70 = vsub.f32 1.0, %v64
    %72 = vrot.lane.b32.xlu0 %v69, 127
    %v73 = vpop.permute.xlu0 %72
    %v75 = vmul.f32 %v70, %v73
    %v76 = vmul.f32 %v75, %v73
    %v77 = vld [vmem:[#allocation2] sm:$0x1]
    %v78 = vadd.f32 %v67, %v76
    %80 = vrot.lane.b32.xlu0 %v78, 2
    %v81 = vpop.permute.xlu0 %80
    %v83 = vmul.f32 %v64, %v81
    %vm84 = vcmask 23568
    %v85 = vsel %vm84, %v83, 0.0
    %v86 = vrot.slane %v85, 4
    %v87 = vadd.f32 %v85, %v86
    %v88 = vrot.slane %v87, 2
    %v89 = vadd.f32 %v87, %v88
    %v90 = vrot.slane %v89, 1
    %v91 = vadd.f32 %v89, %v90
    %93 = vrot.lane.b32.xlu0 %v91, 126
    %v94 = vpop.permute.xlu0 %93
    %v96 = vadd.f32 %v77, %v94
    %vm97 = vcmask 0
    %98 = vst.msk [vmem:[#allocation2] sm:$0x1] %vm97, %v96
    // Predicated region
    $region22: #{tpu_custom_call.1} parent=1 // pred_check
      %p99 = pneg %p29
    $region23: #{tpu_custom_call.1} parent=1 // pred_check_branch
      %101 = sbr.rel (%p99) target = $region25
    $region24: #{tpu_custom_call.1} parent=1 // pred_region
      %v102 = vld [vmem:[#allocation2] sm:$0x1]
      %s103 = vtos %v102
      %s104 = smul.f32 %s103, 0.125
      %s105 = scalar_lea.smem [#allocation6], 0
      %106 = sst [smem:[%s105]] %s104
    $region25: #{tpu_custom_call.1} parent=1 // pred_fallthru
      _
    // Predicated region
    $region26: #{tpu_custom_call.1} parent=1 // pred_check
      _
    $region27: #{tpu_custom_call.1} parent=1 // pred_check_branch
      %108 = sbr.rel (0) target = $region29
    $region28: #{tpu_custom_call.1} parent=1 // pred_region
      %110 = vsyncadd [#allocation5], 0
      %s112 = sshll.u32 %s3, 4
      %s113 = int_to_ptr.hbm [resolvable:$true] %s112
      %115 = dma.smem_to_hbm [#allocation6], 16, %s113, [#allocation5]
    $region29: #{tpu_custom_call.1} parent=1 // pred_fallthru
      _
    // Predicated region
    $region30: #{tpu_custom_call.1} parent=1 // pred_check
      _
    $region31: #{tpu_custom_call.1} parent=1 // pred_check_branch
      %117 = sbr.rel (0) target = $region33
    $region32: #{tpu_custom_call.1} parent=1 // pred_region
      %119 = dma.done [#allocation5], 16
    $region33: #{tpu_custom_call.1} parent=1 // pred_fallthru
      _
    %120 = sfence
    %121 = vsyncpa [#allocation4], 1
    %122 = vsyncpa [#allocation5], 1

</llo_original>
